<compile_context>
chip_gen: v7x
topology: tpu7x:2x2x1
jax: 0.10.0
libtpu: 0.0.40
codegen_flags: <defaults>
</compile_context>

<pallas_src>
import math

import jax
import jax.numpy as jnp
from jax.experimental import pallas as pl
from jax.experimental.pallas import tpu as pltpu


# ------------------------------ fused kernel --------------------------------
def _attention_body(x, w_row, m, out_ref, sc_ref):
    """x: (B, L, D) f32, w_row: (1, D) f32, m: (B, 1, L) f32 or None."""
    b, _, d = x.shape
    # Broadcast the projection weight across the batch so both contractions
    # are plain batched 3-D einsums (flash-attention lowering pattern).
    w = jnp.broadcast_to(w_row[None, :, :], (b, 1, d))              # (B, 1, D)

    # scores = inputs @ W^T, produced directly as (B, 1, L).  (The Linear bias
    # is omitted: a per-row scalar shift cancels under softmax.)
    s = jnp.einsum("bqd,bld->bql", w, x,
                   preferred_element_type=jnp.float32)              # (B, 1, L)

    if m is not None:
        # masked_fill(mask == 0, -inf): finite sentinel keeps fully-masked
        # rows NaN-free (uniform distribution instead of NaN).
        s = jnp.where(m == 0.0, jnp.float32(-1e30), s)

    # Row softmax over keys (lane axis), exact reciprocal for parity.
    s = s - jnp.max(s, axis=-1, keepdims=True)
    e = jnp.exp(s)
    p = e * pl.reciprocal(jnp.sum(e, axis=-1, keepdims=True), approx=False)

    sc_ref[...] = p                                                  # (B, 1, L)
    # outputs = attention-weighted sum: (B, 1, L) @ (B, L, D) -> (B, 1, D)
    out_ref[...] = jnp.einsum("bql,bld->bqd", p, x,
                              preferred_element_type=jnp.float32)


def _masked_kernel(x_ref, m_ref, w_ref, out_ref, sc_ref):
    _attention_body(x_ref[...], w_ref[...], m_ref[...], out_ref, sc_ref)


def _unmasked_kernel(x_ref, w_ref, out_ref, sc_ref):
    _attention_body(x_ref[...], w_ref[...], None, out_ref, sc_ref)


# ------------------------------ module wrapper -------------------------------
def mask_attention(inputs, mask, weight, bias=None):
    """inputs: (B, L, D) f32, mask: (B, L) or None, weight: (1, D), bias: (1,).

    Returns (outputs (B, D), scores (B, 1, L)) — same as the PyTorch module.
    `bias` is accepted for interface parity but is a softmax no-op, so it is
    never sent to the kernel.
    """
    del bias  # cancels under softmax for both returned tensors
    b, l, d = inputs.shape
    inputs = inputs.astype(jnp.float32)
    weight = weight.astype(jnp.float32).reshape(1, d)

    x_spec = pl.BlockSpec((b, l, d), lambda i: (0, 0, 0))
    w_spec = pl.BlockSpec((1, d), lambda i: (0, 0))
    out_specs = [
        pl.BlockSpec((b, 1, d), lambda i: (0, 0, 0)),   # outputs
        pl.BlockSpec((b, 1, l), lambda i: (0, 0, 0)),   # softmax scores
    ]
    out_shape = (
        jax.ShapeDtypeStruct((b, 1, d), jnp.float32),
        jax.ShapeDtypeStruct((b, 1, l), jnp.float32),
    )
    params = pltpu.CompilerParams(
        dimension_semantics=("arbitrary",),      # single step; no megacore claim
        vmem_limit_bytes=32 * 1024 * 1024,       # explicit budget, v7x-safe
    )

    if mask is None:
        out, scores = pl.pallas_call(
            _unmasked_kernel,
            grid=(1,),
            in_specs=[x_spec, w_spec],
            out_specs=out_specs,
            out_shape=out_shape,
            compiler_params=params,
        )(inputs, weight)
    else:
        mask3 = mask.astype(jnp.float32).reshape(b, 1, l)
        m_spec = pl.BlockSpec((b, 1, l), lambda i: (0, 0, 0))
        out, scores = pl.pallas_call(
            _masked_kernel,
            grid=(1,),
            in_specs=[x_spec, m_spec, w_spec],
            out_specs=out_specs,
            out_shape=out_shape,
            compiler_params=params,
        )(inputs, mask3, weight)

    return out.reshape(b, d), scores


def init_params(key, d_model):
    """Deterministic params matching torch.nn.Linear(d_model, 1) default init."""
    k_w, k_b = jax.random.split(key)
    bound = 1.0 / math.sqrt(d_model)
    weight = jax.random.uniform(k_w, (1, d_model), jnp.float32, -bound, bound)
    bias = jax.random.uniform(k_b, (1,), jnp.float32, -bound, bound)
    return weight, bias


if __name__ == "__main__":
    B, L, D = 2, 8, 32

    key = jax.random.PRNGKey(0)
    k_p, k_x = jax.random.split(key)
    weight, bias = init_params(k_p, D)
    inputs = jax.random.normal(k_x, (B, L, D), jnp.float32)
    # Binary key mask: batch 0 fully visible, batch 1 has the last 3 keys masked.
    mask = jnp.array(
        [[1, 1, 1, 1, 1, 1, 1, 1],
         [1, 1, 1, 1, 1, 0, 0, 0]], jnp.float32)

    # Masked path.
    outputs, scores = mask_attention(inputs, mask, weight, bias)
    outputs = jax.block_until_ready(outputs)
    scores = jax.block_until_ready(scores)

    # Pure-JAX reference (mirrors the PyTorch forward exactly, bias included —
    # it cancels under softmax, demonstrating the in-kernel bias removal).
    s_ref = jnp.einsum("bld,od->bl", inputs, weight) + bias[0]
    s_ref = jnp.where(mask == 0, -jnp.inf, s_ref)
    p_ref = jax.nn.softmax(s_ref, axis=-1)
    o_ref = jnp.einsum("bl,bld->bd", p_ref, inputs)

    assert outputs.shape == (B, D)
    assert scores.shape == (B, 1, L)
    assert bool(jnp.allclose(outputs, o_ref, rtol=1e-2, atol=1e-2))
    assert bool(jnp.allclose(scores[:, 0, :], p_ref, rtol=1e-2, atol=1e-2))

    # No-mask path (dedicated kernel variant: no mask stream, no select).
    outputs_nm, scores_nm = mask_attention(inputs, None, weight, bias)
    outputs_nm = jax.block_until_ready(outputs_nm)
    scores_nm = jax.block_until_ready(scores_nm)
    p_ref_nm = jax.nn.softmax(
        jnp.einsum("bld,od->bl", inputs, weight) + bias[0], axis=-1)
    o_ref_nm = jnp.einsum("bl,bld->bd", p_ref_nm, inputs)
    assert bool(jnp.allclose(outputs_nm, o_ref_nm, rtol=1e-2, atol=1e-2))
    assert bool(jnp.allclose(scores_nm[:, 0, :], p_ref_nm, rtol=1e-2, atol=1e-2))

    print("KERNEL_OK")
</pallas_src>

<mosaic_0001>
module attributes {stable_mosaic.version = 11 : i64} {
  func.func @_masked_kernel(%arg0: i32, %arg1: memref<2x8x32xf32, #tpu.memory_space<vmem>>, %arg2: memref<2x1x8xf32, #tpu.memory_space<vmem>>, %arg3: memref<1x32xf32, #tpu.memory_space<vmem>>, %arg4: memref<2x1x32xf32, #tpu.memory_space<vmem>>, %arg5: memref<2x1x8xf32, #tpu.memory_space<vmem>>) attributes {dimension_semantics = [#tpu.dimension_semantics<arbitrary>], iteration_bounds = array<i64: 1>, scalar_prefetch = 0 : i64, scratch_operands = 0 : i64, tpu.core_type = #tpu.core_type<tc>, window_params = [{pipeline_mode = #tpu.pipeline_mode<synchronous>, transform_indices = @transform_0, window_bounds = array<i64: 2, 8, 32>}, {pipeline_mode = #tpu.pipeline_mode<synchronous>, transform_indices = @transform_1, window_bounds = array<i64: 2, 1, 8>}, {pipeline_mode = #tpu.pipeline_mode<synchronous>, transform_indices = @transform_2, window_bounds = array<i64: 1, 32>}, {pipeline_mode = #tpu.pipeline_mode<synchronous>, transform_indices = @transform_3, window_bounds = array<i64: 2, 1, 32>}, {pipeline_mode = #tpu.pipeline_mode<synchronous>, transform_indices = @transform_4, window_bounds = array<i64: 2, 1, 8>}]} {
    %c0 = arith.constant 0 : index
    %c0_0 = arith.constant 0 : index
    %c0_1 = arith.constant 0 : index
    %0 = vector.load %arg1[%c0, %c0_0, %c0_1] : memref<2x8x32xf32, #tpu.memory_space<vmem>>, vector<2x8x32xf32>
    %c0_2 = arith.constant 0 : index
    %c0_3 = arith.constant 0 : index
    %1 = vector.load %arg3[%c0_2, %c0_3] : memref<1x32xf32, #tpu.memory_space<vmem>>, vector<1x32xf32>
    %c0_4 = arith.constant 0 : index
    %c0_5 = arith.constant 0 : index
    %c0_6 = arith.constant 0 : index
    %2 = vector.load %arg2[%c0_4, %c0_5, %c0_6] : memref<2x1x8xf32, #tpu.memory_space<vmem>>, vector<2x1x8xf32>
    %3 = vector.shape_cast %1 : vector<1x32xf32> to vector<1x1x32xf32>
    %4 = vector.shape_cast %3 : vector<1x1x32xf32> to vector<1x1x32xf32>
    %5 = vector.broadcast %4 : vector<1x1x32xf32> to vector<2x1x32xf32>
    "tpu.trace_start"() <{level = 10 : i32, message = "bqd,bld->bql"}> : () -> ()
    %cst = arith.constant dense<0.000000e+00> : vector<2x1x8xf32>
    %6 = tpu.matmul %5, %0, %cst {dimension_numbers = #tpu.dot_dimension_numbers<[2], [2], [1], [1], [0, 0, 0, 1, 1, 1], [0], [0]>} : vector<2x1x32xf32>, vector<2x8x32xf32>, vector<2x1x8xf32> -> vector<2x1x8xf32>
    %cst_7 = arith.constant 0.000000e+00 : f32
    "tpu.trace_stop"() : () -> ()
    %7 = vector.broadcast %cst_7 : f32 to vector<2x1x8xf32>
    %8 = arith.cmpf oeq, %2, %7 : vector<2x1x8xf32>
    %cst_8 = arith.constant -1.000000e+30 : f32
    %9 = vector.broadcast %cst_8 : f32 to vector<2x1x8xf32>
    %10 = arith.select %8, %9, %6 : vector<2x1x8xi1>, vector<2x1x8xf32>
    %cst_9 = arith.constant dense<0xFF800000> : vector<2x1xf32>
    %11 = vector.multi_reduction <maximumf>, %10, %cst_9 [2] : vector<2x1x8xf32> to vector<2x1xf32>
    %12 = vector.shape_cast %11 : vector<2x1xf32> to vector<2x1x1xf32>
    %13 = vector.broadcast %12 : vector<2x1x1xf32> to vector<2x1x8xf32>
    %14 = arith.subf %10, %13 : vector<2x1x8xf32>
    %15 = math.exp %14 : vector<2x1x8xf32>
    %cst_10 = arith.constant dense<0.000000e+00> : vector<2x1xf32>
    %16 = vector.multi_reduction <add>, %15, %cst_10 [2] : vector<2x1x8xf32> to vector<2x1xf32>
    %17 = vector.shape_cast %16 : vector<2x1xf32> to vector<2x1x1xf32>
    %18 = tpu.reciprocal %17 : vector<2x1x1xf32> -> vector<2x1x1xf32>
    %19 = vector.broadcast %18 : vector<2x1x1xf32> to vector<2x1x8xf32>
    %20 = arith.mulf %15, %19 : vector<2x1x8xf32>
    %c0_11 = arith.constant 0 : index
    %c0_12 = arith.constant 0 : index
    %c0_13 = arith.constant 0 : index
    %21 = vector.load %arg5[%c0_11, %c0_12, %c0_13] : memref<2x1x8xf32, #tpu.memory_space<vmem>>, vector<2x1x8xf32>
    tpu.vector_store %arg5[%c0_11, %c0_12, %c0_13], %20 {strides = array<i32>} : memref<2x1x8xf32, #tpu.memory_space<vmem>>, vector<2x1x8xf32>,
    "tpu.trace_start"() <{level = 10 : i32, message = "bql,bld->bqd"}> : () -> ()
    %cst_14 = arith.constant dense<0.000000e+00> : vector<2x1x32xf32>
    %22 = tpu.matmul %20, %0, %cst_14 {dimension_numbers = #tpu.dot_dimension_numbers<[2], [1], [1], [2], [0, 0, 0, 1, 1, 2], [0], [0]>} : vector<2x1x8xf32>, vector<2x8x32xf32>, vector<2x1x32xf32> -> vector<2x1x32xf32>
    "tpu.trace_stop"() : () -> ()
    %c0_15 = arith.constant 0 : index
    %c0_16 = arith.constant 0 : index
    %c0_17 = arith.constant 0 : index
    %23 = vector.load %arg4[%c0_15, %c0_16, %c0_17] : memref<2x1x32xf32, #tpu.memory_space<vmem>>, vector<2x1x32xf32>
    tpu.vector_store %arg4[%c0_15, %c0_16, %c0_17], %22 {strides = array<i32>} : memref<2x1x32xf32, #tpu.memory_space<vmem>>, vector<2x1x32xf32>,
    return
  }
  func.func @transform_0(%arg0: i32) -> (i32, i32, i32) {
    %c0_i32 = arith.constant 0 : i32
    %c0_i32_0 = arith.constant 0 : i32
    %c0_i32_1 = arith.constant 0 : i32
    %c0_i32_2 = arith.constant 0 : i32
    return %c0_i32, %c0_i32_0, %c0_i32_1 : i32, i32, i32
  }
  func.func @transform_1(%arg0: i32) -> (i32, i32, i32) {
    %c0_i32 = arith.constant 0 : i32
    %c0_i32_0 = arith.constant 0 : i32
    %c0_i32_1 = arith.constant 0 : i32
    %c0_i32_2 = arith.constant 0 : i32
    return %c0_i32, %c0_i32_0, %c0_i32_1 : i32, i32, i32
  }
  func.func @transform_2(%arg0: i32) -> (i32, i32) {
    %c0_i32 = arith.constant 0 : i32
    %c0_i32_0 = arith.constant 0 : i32
    %c0_i32_1 = arith.constant 0 : i32
    return %c0_i32, %c0_i32_0 : i32, i32
  }
  func.func @transform_3(%arg0: i32) -> (i32, i32, i32) {
    %c0_i32 = arith.constant 0 : i32
    %c0_i32_0 = arith.constant 0 : i32
    %c0_i32_1 = arith.constant 0 : i32
    %c0_i32_2 = arith.constant 0 : i32
    return %c0_i32, %c0_i32_0, %c0_i32_1 : i32, i32, i32
  }
  func.func @transform_4(%arg0: i32) -> (i32, i32, i32) {
    %c0_i32 = arith.constant 0 : i32
    %c0_i32_0 = arith.constant 0 : i32
    %c0_i32_1 = arith.constant 0 : i32
    %c0_i32_2 = arith.constant 0 : i32
    return %c0_i32, %c0_i32_0, %c0_i32_1 : i32, i32, i32
  }
}

</mosaic_0001>

<llo_original>
// kernel: tpu_custom_call.1
$region0: #{tpu_custom_call.1}
  #allocation0 [shape = 'u32[]', space=smem, size = 0x4, offset = 0x4, fixed_abs, tag = 'smem constant byte address 0x4 - core index']
  #allocation1 [shape = 'u32[144,128]{1,0:T(1,128)}', space=vmem, size = 0x12000, scoped, tag = 'internal scratch']
  %s0 = inlined_call_operand.hbm [shape: f32[2,8,32], index: 0, kind: input, shape index: {}]
  %s1 = inlined_call_operand.vmem [shape: f32[2,1,8], index: 1, kind: input, shape index: {}]
  %s2 = inlined_call_operand.vmem [shape: f32[1,32], index: 2, kind: input, shape index: {}]
  %s3 = inlined_call_operand.hbm [shape: f32[2,1,32], index: 3, kind: output, shape index: {0}]
  %s4 = inlined_call_operand.hbm [shape: f32[2,1,8], index: 4, kind: output, shape index: {1}]
  %5 = xla_tuple %s3, %s4
  %s6 = sld [smem:[#allocation0]]
  $region34: #{tpu_custom_call.1} parent=0
    _
  %s8 = ssub.s32 1, %s6
  %s9 = scalar_select 0, %s8, %s6
  $region1: #{tpu_custom_call.1} parent=0
    #allocation2 [shape = 'u8[8192]{0}', space=vmem, size = 0x2000, scoped, tag = 'input window, operand 0, single buffered']
    #allocation3 [shape = 's32[1]{0}', space=sflag, size = 0x4, scoped, tag = 'scoped memory for tpu_custom_call.1']
    #allocation4 [shape = 's32[1]{0}', space=sflag, size = 0x4, scoped, tag = 'scoped memory for tpu_custom_call.1']
    #allocation5 [shape = 'u8[1024]{0}', space=vmem, size = 0x400, scoped, tag = 'output window, operand 0, single buffered']
    #allocation6 [shape = 'u8[1024]{0}', space=vmem, size = 0x400, scoped, tag = 'output window, operand 1, single buffered']
    #allocation7 [shape = 's32[1]{0}', space=sflag, size = 0x4, scoped, tag = 'scoped memory for tpu_custom_call.1']
    %10 = vsyncpa [#allocation3], 0
    %11 = vsyncpa [#allocation4], 0
    %12 = vsyncpa [#allocation7], 0
    // Predicated region
    $region2: #{tpu_custom_call.1} parent=1 // pred_check
      _
    $region3: #{tpu_custom_call.1} parent=1 // pred_check_branch
      %14 = sbr.rel (0) target = $region5
    $region4: #{tpu_custom_call.1} parent=1 // pred_region
      %s16 = ssub.s32 256, 256
      %17 = vsyncadd [#allocation3], %s16
      %s18 = sshll.u32 [#allocation2], 4
      %s19 = int_to_ptr.vmem [resolvable:$true] %s18
      %24 = dma.hbm_to_vmem [thread:$0]  %s0, 256, %s19, [#allocation3], 128, 128, 8
    $region5: #{tpu_custom_call.1} parent=1 // pred_fallthru
      _
    // Predicated region
    $region6: #{tpu_custom_call.1} parent=1 // pred_check
      _
    $region7: #{tpu_custom_call.1} parent=1 // pred_check_branch
      %26 = sbr.rel (0) target = $region9
    $region8: #{tpu_custom_call.1} parent=1 // pred_region
      _
    $region9: #{tpu_custom_call.1} parent=1 // pred_fallthru
      _
    // Predicated region
    $region10: #{tpu_custom_call.1} parent=1 // pred_check
      _
    $region11: #{tpu_custom_call.1} parent=1 // pred_check_branch
      %28 = sbr.rel (0) target = $region13
    $region12: #{tpu_custom_call.1} parent=1 // pred_region
      _
    $region13: #{tpu_custom_call.1} parent=1 // pred_fallthru
      _
    // Predicated region
    $region14: #{tpu_custom_call.1} parent=1 // pred_check
      _
    $region15: #{tpu_custom_call.1} parent=1 // pred_check_branch
      %30 = sbr.rel (0) target = $region17
    $region16: #{tpu_custom_call.1} parent=1 // pred_region
      %31 = dma.done [#allocation3], 256
    $region17: #{tpu_custom_call.1} parent=1 // pred_fallthru
      _
    %v32 = vld [vmem:[#allocation2] sm:$0xff]
    %v33 = vld [vmem:[#allocation2 + $0x8] sm:$0xff]
    %v34 = vld [vmem:[%s2] sm:$0x1]
    %v35 = vld [vmem:[%s1] sm:$0x1]
    %v36 = vld [vmem:[%s1 + $0x1] sm:$0x1]
    %vm37 = vcmask 261120
    %v39 = vsel %vm37, %v34, 0
    %v42 = vsel %vm37, %v32, 0
    %44 = vmatprep.subr.mxu0 0.0
    %45 = vmatpush1.xpose.msra.mxu0 %v42
    %46 = vmatprep.subr.mxu0 0.0
    %47 = vmatpush1.xpose.msra.mxu0 0.0
    %48 = vmatprep.subr.mxu0 0.0
    %49 = vmatpush1.xpose.msra.mxu0 0.0
    %50 = vmatprep.subr.mxu0 0.0
    %51 = vmatpush1.xpose.msra.mxu0 0.0
    %52 = vmatprep.subr.mxu0 0.0
    %53 = vmatpush1.xpose.msra.mxu0 0.0
    %54 = vmatprep.subr.mxu0 0.0
    %55 = vmatpush1.xpose.msra.mxu0 0.0
    %56 = vmatprep.subr.mxu0 0.0
    %57 = vmatpush1.xpose.msra.mxu0 0.0
    %58 = vmatprep.subr.mxu0 0.0
    %59 = vmatpush1.xpose.msra.mxu0 0.0
    %60 = vmatprep.subr.mxu0 0.0
    %61 = vmatpush1.xpose.msra.mxu0 0.0
    %62 = vmatprep.subr.mxu0 0.0
    %63 = vmatpush1.xpose.msra.mxu0 0.0
    %64 = vmatprep.subr.mxu0 0.0
    %65 = vmatpush1.xpose.msra.mxu0 0.0
    %66 = vmatprep.subr.mxu0 0.0
    %67 = vmatpush1.xpose.msra.mxu0 0.0
    %68 = vmatprep.subr.mxu0 0.0
    %69 = vmatpush1.xpose.msra.mxu0 0.0
    %70 = vmatprep.subr.mxu0 0.0
    %71 = vmatpush1.xpose.msra.mxu0 0.0
    %72 = vmatprep.subr.mxu0 0.0
    %73 = vmatpush1.xpose.msra.mxu0 0.0
    %74 = vmatprep.subr.mxu0 0.0
    %75 = vmatpush1.xpose.msra.mxu0 0.0
    %76 = vmatprep.subr.mxu0 0.0
    %77 = vmatpush1.xpose.msra.mxu0 0.0
    %78 = vmatprep.subr.mxu0 0.0
    %79 = vmatpush1.xpose.msra.mxu0 0.0
    %80 = vmatprep.subr.mxu0 0.0
    %81 = vmatpush1.xpose.msra.mxu0 0.0
    %82 = vmatprep.subr.mxu0 0.0
    %83 = vmatpush1.xpose.msra.mxu0 0.0
    %84 = vmatprep.subr.mxu0 0.0
    %85 = vmatpush1.xpose.msra.mxu0 0.0
    %86 = vmatprep.subr.mxu0 0.0
    %87 = vmatpush1.xpose.msra.mxu0 0.0
    %88 = vmatprep.subr.mxu0 0.0
    %89 = vmatpush1.xpose.msra.mxu0 0.0
    %90 = vmatprep.subr.mxu0 0.0
    %91 = vmatpush1.xpose.msra.mxu0 0.0
    %92 = vmatprep.subr.mxu0 0.0
    %93 = vmatpush1.xpose.msra.mxu0 0.0
    %94 = vmatprep.subr.mxu0 0.0
    %95 = vmatpush1.xpose.msra.mxu0 0.0
    %96 = vmatprep.subr.mxu0 0.0
    %97 = vmatpush1.xpose.msra.mxu0 0.0
    %98 = vmatprep.subr.mxu0 0.0
    %99 = vmatpush1.xpose.msra.mxu0 0.0
    %100 = vmatprep.subr.mxu0 0.0
    %101 = vmatpush1.xpose.msra.mxu0 0.0
    %102 = vmatprep.subr.mxu0 0.0
    %103 = vmatpush1.xpose.msra.mxu0 0.0
    %104 = vmatprep.subr.mxu0 0.0
    %105 = vmatpush1.xpose.msra.mxu0 0.0
    %106 = vmatprep.subr.mxu0 0.0
    %107 = vmatpush1.xpose.msra.mxu0 0.0
    %108 = vmatprep.mubr.f32.mxu0 0.0
    %109 = vmatmul.mubr.f32.gmra.mrb[0].mxu0 %v39
    %v110 = vpop.f32.mrb[0].mxu0
    %v111 = vadd.f32 0.0, %v110
    %v112 = vpop.f32.mrb[0].mxu0
    %113 = vdwg.mxu0
    %v115 = vsel %vm37, %v33, 0
    %117 = vmatprep.subr.mxu0 0.0
    %118 = vmatpush1.xpose.msra.mxu0 %v115
    %119 = vmatprep.subr.mxu0 0.0
    %120 = vmatpush1.xpose.msra.mxu0 0.0
    %121 = vmatprep.subr.mxu0 0.0
    %122 = vmatpush1.xpose.msra.mxu0 0.0
    %123 = vmatprep.subr.mxu0 0.0
    %124 = vmatpush1.xpose.msra.mxu0 0.0
    %125 = vmatprep.subr.mxu0 0.0
    %126 = vmatpush1.xpose.msra.mxu0 0.0
    %127 = vmatprep.subr.mxu0 0.0
    %128 = vmatpush1.xpose.msra.mxu0 0.0
    %129 = vmatprep.subr.mxu0 0.0
    %130 = vmatpush1.xpose.msra.mxu0 0.0
    %131 = vmatprep.subr.mxu0 0.0
    %132 = vmatpush1.xpose.msra.mxu0 0.0
    %133 = vmatprep.subr.mxu0 0.0
    %134 = vmatpush1.xpose.msra.mxu0 0.0
    %135 = vmatprep.subr.mxu0 0.0
    %136 = vmatpush1.xpose.msra.mxu0 0.0
    %137 = vmatprep.subr.mxu0 0.0
    %138 = vmatpush1.xpose.msra.mxu0 0.0
    %139 = vmatprep.subr.mxu0 0.0
    %140 = vmatpush1.xpose.msra.mxu0 0.0
    %141 = vmatprep.subr.mxu0 0.0
    %142 = vmatpush1.xpose.msra.mxu0 0.0
    %143 = vmatprep.subr.mxu0 0.0
    %144 = vmatpush1.xpose.msra.mxu0 0.0
    %145 = vmatprep.subr.mxu0 0.0
    %146 = vmatpush1.xpose.msra.mxu0 0.0
    %147 = vmatprep.subr.mxu0 0.0
    %148 = vmatpush1.xpose.msra.mxu0 0.0
    %149 = vmatprep.subr.mxu0 0.0
    %150 = vmatpush1.xpose.msra.mxu0 0.0
    %151 = vmatprep.subr.mxu0 0.0
    %152 = vmatpush1.xpose.msra.mxu0 0.0
    %153 = vmatprep.subr.mxu0 0.0
    %154 = vmatpush1.xpose.msra.mxu0 0.0
    %155 = vmatprep.subr.mxu0 0.0
    %156 = vmatpush1.xpose.msra.mxu0 0.0
    %157 = vmatprep.subr.mxu0 0.0
    %158 = vmatpush1.xpose.msra.mxu0 0.0
    %159 = vmatprep.subr.mxu0 0.0
    %160 = vmatpush1.xpose.msra.mxu0 0.0
    %161 = vmatprep.subr.mxu0 0.0
    %162 = vmatpush1.xpose.msra.mxu0 0.0
    %163 = vmatprep.subr.mxu0 0.0
    %164 = vmatpush1.xpose.msra.mxu0 0.0
    %165 = vmatprep.subr.mxu0 0.0
    %166 = vmatpush1.xpose.msra.mxu0 0.0
    %167 = vmatprep.subr.mxu0 0.0
    %168 = vmatpush1.xpose.msra.mxu0 0.0
    %169 = vmatprep.subr.mxu0 0.0
    %170 = vmatpush1.xpose.msra.mxu0 0.0
    %171 = vmatprep.subr.mxu0 0.0
    %172 = vmatpush1.xpose.msra.mxu0 0.0
    %173 = vmatprep.subr.mxu0 0.0
    %174 = vmatpush1.xpose.msra.mxu0 0.0
    %175 = vmatprep.subr.mxu0 0.0
    %176 = vmatpush1.xpose.msra.mxu0 0.0
    %177 = vmatprep.subr.mxu0 0.0
    %178 = vmatpush1.xpose.msra.mxu0 0.0
    %179 = vmatprep.subr.mxu0 0.0
    %180 = vmatpush1.xpose.msra.mxu0 0.0
    %181 = vmatprep.mubr.f32.mxu0 0.0
    %182 = vmatmul.mubr.f32.gmra.mrb[0].mxu0 %v39
    %v183 = vpop.f32.mrb[0].mxu0
    %v184 = vadd.f32 0.0, %v183
    %v185 = vpop.f32.mrb[0].mxu0
    %186 = vdwg.mxu0
    %vm187 = vcmp.eq.f32.partialorder %v35, 0.0
    %vm188 = vcmp.eq.f32.partialorder %v36, 0.0
    %v189 = vsel %vm187, -1e+30, %v111
    %v190 = vsel %vm188, -1e+30, %v184
    %vm191 = vcmask 57344
    %v192 = vsel %vm191, %v189, -inf
    %193 = vmax.xlane.f32.xlu0 %v192
    %v194 = vpop.xlane.xlu0 %193
    %v195 = vsel %vm191, %v190, -inf
    %196 = vmax.xlane.f32.xlu0 %v195
    %v197 = vpop.xlane.xlu0 %196
    %v198 = vsub.f32 %v189, %v194
    %v199 = vsub.f32 %v190, %v197
    %v200 = vmul.f32 %v198, 1.442695
    %v201 = vpow.pop %v200
    %v202 = vmul.f32 %v199, 1.442695
    %v203 = vpow.pop %v202
    %v204 = vsel %vm191, %v201, 0.0
    %205 = vadd.xlane.f32.xlu0 %v204
    %v206 = vpop.xlane.xlu0 %205
    %v207 = vsel %vm191, %v203, 0.0
    %208 = vadd.xlane.f32.xlu0 %v207
    %v209 = vpop.xlane.xlu0 %208
    %v210 = vrcp.pop %v206
    %v211 = vrcp.pop %v209
    %v212 = vmul.f32 %v201, %v210
    %v213 = vmul.f32 %v203, %v211
    %214 = vst.msk [vmem:[#allocation6] sm:$0x1] %vm191, %v212
    %215 = vst.msk [vmem:[#allocation6 + $0x1] sm:$0x1] %vm191, %v213
    %vm216 = vcmask 64512
    %v218 = vsel %vm216, %v212, 0
    %220 = vmatprep.subr.mxu0 0.0
    %221 = vmatpush1.msra.mxu0 %v32
    %222 = vmatprep.subr.mxu0 0.0
    %223 = vmatpush1.msra.mxu0 0.0
    %224 = vmatprep.subr.mxu0 0.0
    %225 = vmatpush1.msra.mxu0 0.0
    %226 = vmatprep.subr.mxu0 0.0
    %227 = vmatpush1.msra.mxu0 0.0
    %228 = vmatprep.subr.mxu0 0.0
    %229 = vmatpush1.msra.mxu0 0.0
    %230 = vmatprep.subr.mxu0 0.0
    %231 = vmatpush1.msra.mxu0 0.0
    %232 = vmatprep.subr.mxu0 0.0
    %233 = vmatpush1.msra.mxu0 0.0
    %234 = vmatprep.subr.mxu0 0.0
    %235 = vmatpush1.msra.mxu0 0.0
    %236 = vmatprep.subr.mxu0 0.0
    %237 = vmatpush1.msra.mxu0 0.0
    %238 = vmatprep.subr.mxu0 0.0
    %239 = vmatpush1.msra.mxu0 0.0
    %240 = vmatprep.subr.mxu0 0.0
    %241 = vmatpush1.msra.mxu0 0.0
    %242 = vmatprep.subr.mxu0 0.0
    %243 = vmatpush1.msra.mxu0 0.0
    %244 = vmatprep.subr.mxu0 0.0
    %245 = vmatpush1.msra.mxu0 0.0
    %246 = vmatprep.subr.mxu0 0.0
    %247 = vmatpush1.msra.mxu0 0.0
    %248 = vmatprep.subr.mxu0 0.0
    %249 = vmatpush1.msra.mxu0 0.0
    %250 = vmatprep.subr.mxu0 0.0
    %251 = vmatpush1.msra.mxu0 0.0
    %252 = vmatprep.subr.mxu0 0.0
    %253 = vmatpush1.msra.mxu0 0.0
    %254 = vmatprep.subr.mxu0 0.0
    %255 = vmatpush1.msra.mxu0 0.0
    %256 = vmatprep.subr.mxu0 0.0
    %257 = vmatpush1.msra.mxu0 0.0
    %258 = vmatprep.subr.mxu0 0.0
    %259 = vmatpush1.msra.mxu0 0.0
    %260 = vmatprep.subr.mxu0 0.0
    %261 = vmatpush1.msra.mxu0 0.0
    %262 = vmatprep.subr.mxu0 0.0
    %263 = vmatpush1.msra.mxu0 0.0
    %264 = vmatprep.subr.mxu0 0.0
    %265 = vmatpush1.msra.mxu0 0.0
    %266 = vmatprep.subr.mxu0 0.0
    %267 = vmatpush1.msra.mxu0 0.0
    %268 = vmatprep.subr.mxu0 0.0
    %269 = vmatpush1.msra.mxu0 0.0
    %270 = vmatprep.subr.mxu0 0.0
    %271 = vmatpush1.msra.mxu0 0.0
    %272 = vmatprep.subr.mxu0 0.0
    %273 = vmatpush1.msra.mxu0 0.0
    %274 = vmatprep.subr.mxu0 0.0
    %275 = vmatpush1.msra.mxu0 0.0
    %276 = vmatprep.subr.mxu0 0.0
    %277 = vmatpush1.msra.mxu0 0.0
    %278 = vmatprep.subr.mxu0 0.0
    %279 = vmatpush1.msra.mxu0 0.0
    %280 = vmatprep.subr.mxu0 0.0
    %281 = vmatpush1.msra.mxu0 0.0
    %282 = vmatprep.subr.mxu0 0.0
    %283 = vmatpush1.msra.mxu0 0.0
    %284 = vmatprep.mubr.f32.mxu0 0.0
    %285 = vmatmul.mubr.f32.gmra.mrb[0].mxu0 %v218
    %v286 = vpop.f32.mrb[0].mxu0
    %v287 = vadd.f32 0.0, %v286
    %v288 = vpop.f32.mrb[0].mxu0
    %289 = vdwg.mxu0
    %v291 = vsel %vm216, %v213, 0
    %293 = vmatprep.subr.mxu0 0.0
    %294 = vmatpush1.msra.mxu0 %v33
    %295 = vmatprep.subr.mxu0 0.0
    %296 = vmatpush1.msra.mxu0 0.0
    %297 = vmatprep.subr.mxu0 0.0
    %298 = vmatpush1.msra.mxu0 0.0
    %299 = vmatprep.subr.mxu0 0.0
    %300 = vmatpush1.msra.mxu0 0.0
    %301 = vmatprep.subr.mxu0 0.0
    %302 = vmatpush1.msra.mxu0 0.0
    %303 = vmatprep.subr.mxu0 0.0
    %304 = vmatpush1.msra.mxu0 0.0
    %305 = vmatprep.subr.mxu0 0.0
    %306 = vmatpush1.msra.mxu0 0.0
    %307 = vmatprep.subr.mxu0 0.0
    %308 = vmatpush1.msra.mxu0 0.0
    %309 = vmatprep.subr.mxu0 0.0
    %310 = vmatpush1.msra.mxu0 0.0
    %311 = vmatprep.subr.mxu0 0.0
    %312 = vmatpush1.msra.mxu0 0.0
    %313 = vmatprep.subr.mxu0 0.0
    %314 = vmatpush1.msra.mxu0 0.0
    %315 = vmatprep.subr.mxu0 0.0
    %316 = vmatpush1.msra.mxu0 0.0
    %317 = vmatprep.subr.mxu0 0.0
    %318 = vmatpush1.msra.mxu0 0.0
    %319 = vmatprep.subr.mxu0 0.0
    %320 = vmatpush1.msra.mxu0 0.0
    %321 = vmatprep.subr.mxu0 0.0
    %322 = vmatpush1.msra.mxu0 0.0
    %323 = vmatprep.subr.mxu0 0.0
    %324 = vmatpush1.msra.mxu0 0.0
    %325 = vmatprep.subr.mxu0 0.0
    %326 = vmatpush1.msra.mxu0 0.0
    %327 = vmatprep.subr.mxu0 0.0
    %328 = vmatpush1.msra.mxu0 0.0
    %329 = vmatprep.subr.mxu0 0.0
    %330 = vmatpush1.msra.mxu0 0.0
    %331 = vmatprep.subr.mxu0 0.0
    %332 = vmatpush1.msra.mxu0 0.0
    %333 = vmatprep.subr.mxu0 0.0
    %334 = vmatpush1.msra.mxu0 0.0
    %335 = vmatprep.subr.mxu0 0.0
    %336 = vmatpush1.msra.mxu0 0.0
    %337 = vmatprep.subr.mxu0 0.0
    %338 = vmatpush1.msra.mxu0 0.0
    %339 = vmatprep.subr.mxu0 0.0
    %340 = vmatpush1.msra.mxu0 0.0
    %341 = vmatprep.subr.mxu0 0.0
    %342 = vmatpush1.msra.mxu0 0.0
    %343 = vmatprep.subr.mxu0 0.0
    %344 = vmatpush1.msra.mxu0 0.0
    %345 = vmatprep.subr.mxu0 0.0
    %346 = vmatpush1.msra.mxu0 0.0
    %347 = vmatprep.subr.mxu0 0.0
    %348 = vmatpush1.msra.mxu0 0.0
    %349 = vmatprep.subr.mxu0 0.0
    %350 = vmatpush1.msra.mxu0 0.0
    %351 = vmatprep.subr.mxu0 0.0
    %352 = vmatpush1.msra.mxu0 0.0
    %353 = vmatprep.subr.mxu0 0.0
    %354 = vmatpush1.msra.mxu0 0.0
    %355 = vmatprep.subr.mxu0 0.0
    %356 = vmatpush1.msra.mxu0 0.0
    %357 = vmatprep.mubr.f32.mxu0 0.0
    %358 = vmatmul.mubr.f32.gmra.mrb[0].mxu0 %v291
    %v359 = vpop.f32.mrb[0].mxu0
    %v360 = vadd.f32 0.0, %v359
    %v361 = vpop.f32.mrb[0].mxu0
    %362 = vdwg.mxu0
    %vm363 = vcmask 253952
    %364 = vst.msk [vmem:[#allocation5] sm:$0x1] %vm363, %v287
    %365 = vst.msk [vmem:[#allocation5 + $0x1] sm:$0x1] %vm363, %v360
    // Predicated region
    $region18: #{tpu_custom_call.1} parent=1 // pred_check
      _
    $region19: #{tpu_custom_call.1} parent=1 // pred_check_branch
      %367 = sbr.rel (0) target = $region21
    $region20: #{tpu_custom_call.1} parent=1 // pred_region
      %s369 = ssub.s32 32, 32
      %370 = vsyncadd [#allocation4], %s369
      %s371 = sshll.u32 [#allocation5], 4
      %s372 = int_to_ptr.vmem [resolvable:$true] %s371
      %377 = dma.vmem_to_hbm [thread:$0]  %s372, 32, %s3, [#allocation4], 16, 16, 1
    $region21: #{tpu_custom_call.1} parent=1 // pred_fallthru
      _
    // Predicated region
    $region22: #{tpu_custom_call.1} parent=1 // pred_check
      _
    $region23: #{tpu_custom_call.1} parent=1 // pred_check_branch
      %379 = sbr.rel (0) target = $region25
    $region24: #{tpu_custom_call.1} parent=1 // pred_region
      %s381 = ssub.s32 32, 32
      %382 = vsyncadd [#allocation7], %s381
      %s383 = sshll.u32 [#allocation6], 4
      %s384 = int_to_ptr.vmem [resolvable:$true] %s383
      %389 = dma.vmem_to_hbm [thread:$0]  %s384, 32, %s4, [#allocation7], 16, 16, 1
    $region25: #{tpu_custom_call.1} parent=1 // pred_fallthru
      _
    // Predicated region
    $region26: #{tpu_custom_call.1} parent=1 // pred_check
      _
    $region27: #{tpu_custom_call.1} parent=1 // pred_check_branch
      %391 = sbr.rel (0) target = $region29
    $region28: #{tpu_custom_call.1} parent=1 // pred_region
      %392 = dma.done [#allocation4], 32
    $region29: #{tpu_custom_call.1} parent=1 // pred_fallthru
      _
    // Predicated region
    $region30: #{tpu_custom_call.1} parent=1 // pred_check
      _
    $region31: #{tpu_custom_call.1} parent=1 // pred_check_branch
      %394 = sbr.rel (0) target = $region33
    $region32: #{tpu_custom_call.1} parent=1 // pred_region
      %395 = dma.done [#allocation7], 32
    $region33: #{tpu_custom_call.1} parent=1 // pred_fallthru
      _
    %396 = vsyncpa [#allocation3], 1
    %397 = vsyncpa [#allocation4], 1
    %398 = vsyncpa [#allocation7], 1

</llo_original>
